<compile_context>
chip_gen: v5e
topology: v5e:2x2
jax: 0.10.0
libtpu: 0.0.40
codegen_flags: <defaults>
</compile_context>

<pallas_src>
import functools

import jax
import jax.numpy as jnp
from jax.experimental import pallas as pl
from jax.experimental.pallas import tpu as pltpu

NUM_ACTION = 5  # env.num_action is external; fixed deterministically here.


def _round_up(n, m):
    return ((n + m - 1) // m) * m


def _block_diag2(w):
    """[[w, 0], [0, w]] for a 2-D (in, out) weight."""
    r, c = w.shape
    z = jnp.zeros((r, c), w.dtype)
    top = jnp.concatenate([w, z], axis=1)
    bot = jnp.concatenate([z, w], axis=1)
    return jnp.concatenate([top, bot], axis=0)


# ---------------------------------------------------------------------------
# Kernel
# ---------------------------------------------------------------------------
def _net_kernel(
    x_ref,                # (BT, 9)  f32 : [loc(5) | s0(2) | s1(2)]
    w1d_ref,              # (4, 256)     compute dtype : blockdiag(w1)
    wkd_ref,              # (256, 128)   compute dtype : blockdiag(wk)
    w2x_ref,              # (9, 128)     compute dtype : w2 loc rows, 0-padded
    w2f_ref,              # (128, 128)   compute dtype : w2 feature rows
    w34_ref,              # (128, 128)   compute dtype : [w3 | w4]
    w56d_ref,             # (128, OW)    compute dtype : blockdiag(w5, w6) padded
    bias_ref,             # (8, 256) f32 : packed biases / row-vectors
    out_ref,              # (BT, OW) f32 : [q(NA) | attn(2) | zero pad]
    *, num_action,
):
    f32 = jnp.float32
    cdt = w1d_ref.dtype                   # matmul-operand dtype (bf16 or f32)
    na = num_action
    ow = out_ref.shape[-1]

    x = x_ref[...]                        # (BT, 9) f32
    xc = x.astype(cdt)                    # single cast of the input slab
    s01 = xc[:, 5:9]                      # (BT, 4) neighbor pair states

    # packed bias / row-vector slab (all f32)
    b1d = bias_ref[0:1, :]                # (1, 256)
    bkd = bias_ref[1:2, 0:128]            # (1, 128)
    wa_m = bias_ref[2:3, 0:128]           # (1, 128)
    wa_lx = bias_ref[3:4, 0:9]            # (1, 9)    (neighbor lanes are zero)
    b2 = bias_ref[4:5, 0:128]             # (1, 128)
    b34 = bias_ref[5:6, 0:128]            # (1, 128)
    b56 = bias_ref[6:7, 0:ow]             # (1, OW)
    wa_k2 = bias_ref[7:8, 0:128]          # (1, 128)  = [wa_k | wa_k]
    ba = bias_ref[7:8, 128:129]           # (1, 1)

    # layer1, both neighbors fused via block-diagonal weight: (BT,4)@(4,256)
    h = jnp.maximum(
        jnp.dot(s01, w1d_ref[...], preferred_element_type=f32) + b1d, 0.0)
    h0 = h[:, :128]
    h1 = h[:, 128:]
    me = (h0 + h1) * 0.5                  # (BT, 128) mean embedding

    # key projection, both neighbors fused: (BT,256)@(256,128) -> [k0|k1]
    k = jnp.maximum(
        jnp.dot(h.astype(cdt), wkd_ref[...], preferred_element_type=f32)
        + bkd, 0.0)                       # (BT, 128)

    # shared score term (identical for both neighbors): VPU mul + XLU reduce.
    shared = (jnp.sum(me * wa_m, axis=-1, keepdims=True)
              + jnp.sum(x * wa_lx, axis=-1, keepdims=True)
              + ba)                       # (BT, 1)

    # per-neighbor key score: VPU mul + two 64-lane XLU reductions (no MXU).
    kk = k * wa_k2                        # (BT, 128)
    sc0 = jnp.sum(kk[:, 0:64], axis=-1, keepdims=True)
    sc1 = jnp.sum(kk[:, 64:128], axis=-1, keepdims=True)
    sc = jnp.concatenate([sc0, sc1], axis=-1) + shared          # (BT, 2)

    # 2-way softmax over the neighbor pair (f32)
    m = jnp.max(sc, axis=-1, keepdims=True)
    e = jnp.exp(sc - m)
    attn = e / jnp.sum(e, axis=-1, keepdims=True)               # (BT, 2)

    # attention-weighted aggregation of the neighbor embeddings
    weighted = attn[:, 0:1] * h0 + attn[:, 1:2] * h1            # (BT, 128)

    # layer2 over [loc | weighted] as split matmuls
    h2 = jnp.maximum(
        jnp.dot(xc, w2x_ref[...], preferred_element_type=f32)
        + jnp.dot(weighted.astype(cdt), w2f_ref[...], preferred_element_type=f32)
        + b2, 0.0)                        # (BT, 128)

    # fused dueling heads
    hv = jnp.maximum(
        jnp.dot(h2.astype(cdt), w34_ref[...], preferred_element_type=f32)
        + b34, 0.0)                       # (BT, 128) = [adv_hidden | sv_hidden]
    head = (jnp.dot(hv.astype(cdt), w56d_ref[...], preferred_element_type=f32)
            + b56)                        # (BT, OW)  = [adv(NA) | sv(1) | 0...]

    adv = head[:, 0:na]
    sv = head[:, na:na + 1]
    q = sv + adv - jnp.mean(adv, axis=-1, keepdims=True)        # f32 dueling

    # single full-row store: [q | attn | zero pad]
    pad = jnp.zeros((q.shape[0], ow - na - 2), f32)
    out_ref[...] = jnp.concatenate([q, attn, pad], axis=-1).astype(out_ref.dtype)


# ---------------------------------------------------------------------------
# Parameter init / packing
# ---------------------------------------------------------------------------
def init_params(key, num_action=NUM_ACTION):
    """Deterministic PyTorch-default-style init; weights stored as (in, out)."""
    def linear(k, fan_in, fan_out):
        kw, kb = jax.random.split(k)
        bound = 1.0 / jnp.sqrt(jnp.float32(fan_in))
        w = jax.random.uniform(kw, (fan_in, fan_out), jnp.float32, -bound, bound)
        b = jax.random.uniform(kb, (1, fan_out), jnp.float32, -bound, bound)
        return w, b

    keys = jax.random.split(key, 8)
    p = {}
    p["w1"], p["b1"] = linear(keys[0], 2, 128)            # layer1
    p["w2"], p["b2"] = linear(keys[1], 128 + 5, 128)      # layer2
    p["w3"], p["b3"] = linear(keys[2], 128, 64)           # layer3
    p["w4"], p["b4"] = linear(keys[3], 128, 64)           # layer4
    p["w5"], p["b5"] = linear(keys[4], 64, num_action)    # layer5
    p["w6"], p["b6"] = linear(keys[5], 64, 1)             # layer6
    p["wk"], p["bk"] = linear(keys[6], 128, 64)           # key
    p["wa"], p["ba"] = linear(keys[7], 64 + 2 + 2 + 1 + 128, 1)  # attention
    return p


def pack_params(params, num_action=NUM_ACTION, compute_dtype=jnp.bfloat16):
    """One-time weight packing (block-diagonals / concatenations / zero pads).

    Matmul operands are cast to `compute_dtype` (bf16 default — MXU-native on
    v5e/v6e/v7x); the bias/row-vector slab stays f32 so accumulation, the
    attention score, softmax and the dueling combine stay f32.
    """
    f32 = jnp.float32
    ow = _round_up(num_action + 2, 8)           # output slab width (8 for NA=5)

    w1, b1 = params["w1"], params["b1"]         # (2,128), (1,128)
    wk, bk = params["wk"], params["bk"]         # (128,64), (1,64)
    wa, ba = params["wa"], params["ba"]         # (197,1), (1,1)
    w2, b2 = params["w2"], params["b2"]         # (133,128), (1,128)
    w3, b3 = params["w3"], params["b3"]         # (128,64), (1,64)
    w4, b4 = params["w4"], params["b4"]         # (128,64), (1,64)
    w5, b5 = params["w5"], params["b5"]         # (64,NA), (1,NA)
    w6, b6 = params["w6"], params["b6"]         # (64,1), (1,1)

    wa_k = wa[0:64]                             # key rows            (64,1)
    wa_m = wa[64:192]                           # mean-embedding rows (128,1)
    wa_l = wa[192:197]                          # state_loc rows      (5,1)

    # --- MXU weights ------------------------------------------------------
    w1d = _block_diag2(w1)                      # (4,256)
    wkd = _block_diag2(wk)                      # (256,128)
    w2x = jnp.concatenate([w2[0:5], jnp.zeros((4, 128), f32)], axis=0)  # (9,128)
    w2f = w2[5:133]                                                     # (128,128)
    w34 = jnp.concatenate([w3, w4], axis=1)     # (128,128) = [w3 | w4]
    top = jnp.concatenate([w5, jnp.zeros((64, ow - num_action), f32)], axis=1)
    bot = jnp.concatenate(
        [jnp.zeros((64, num_action), f32), w6,
         jnp.zeros((64, ow - num_action - 1), f32)], axis=1)
    w56d = jnp.concatenate([top, bot], axis=0)  # (128, ow)

    # --- bias / row-vector slab (8, 256), f32 -------------------------------
    def row(v, width=256):
        v = v.reshape(1, -1).astype(f32)
        return jnp.pad(v, ((0, 0), (0, width - v.shape[1])))

    b1d = jnp.concatenate([b1, b1], axis=1)                       # (1,256)
    bkd = jnp.concatenate([bk, bk], axis=1)                       # (1,128)
    b34 = jnp.concatenate([b3, b4], axis=1)                       # (1,128)
    b56 = jnp.concatenate(
        [b5, b6, jnp.zeros((1, ow - num_action - 1), f32)], axis=1)  # (1, ow)
    wa_lx = jnp.concatenate([wa_l, jnp.zeros((4, 1), f32)], axis=0).T  # (1,9)
    wa_k2 = jnp.concatenate([wa_k, wa_k], axis=0).T               # (1,128)
    row7 = jnp.concatenate(
        [wa_k2, ba, jnp.zeros((1, 256 - 129), f32)], axis=1)      # (1,256)

    bias = jnp.concatenate(
        [row(b1d), row(bkd), row(wa_m.T), row(wa_lx),
         row(b2), row(b34), row(b56), row7], axis=0)              # (8,256)

    mm = lambda a: a.astype(compute_dtype)
    return {
        "w1d": mm(w1d), "wkd": mm(wkd),
        "w2x": mm(w2x), "w2f": mm(w2f),
        "w34": mm(w34), "w56d": mm(w56d),
        "bias": bias,
    }


# ---------------------------------------------------------------------------
# Wrapper
# ---------------------------------------------------------------------------
def _tpu_generation():
    try:
        kind = jax.devices()[0].device_kind.lower()
    except Exception:
        return ""
    for g in ("v7", "v6", "v5"):
        if g in kind:
            return g
    return ""


def net_forward(packed, x, num_action=NUM_ACTION, block_rows=None):
    """x: (B, 9) f32 -> (action_value (B, num_action), attn (B, 2))."""
    B = x.shape[0]
    ow = _round_up(num_action + 2, 8)

    gen = _tpu_generation()
    if gen in ("v5", "v6"):
        default_rows, vmem_limit = 4096, 64 * 1024 * 1024   # 128 MiB VMEM parts
    elif gen == "v7":
        default_rows, vmem_limit = 2048, 48 * 1024 * 1024   # 64 MiB VMEM, 2 TCs
    else:
        default_rows, vmem_limit = 1024, 32 * 1024 * 1024   # conservative fallback
    cap = _round_up(block_rows if block_rows is not None else default_rows, 8)
    if gen == "v7" and B >= 16:
        # ensure >= 2 grid steps so both TensorCores get work
        cap = min(cap, _round_up(pl.cdiv(B, 2), 8))

    if B <= cap:
        bt = B            # single exact full-extent block (no padding, no OOB)
    else:
        bt = cap          # ragged tail handled by Pallas OOB block masking
    grid = (pl.cdiv(B, bt),)

    weight_names = ["w1d", "wkd", "w2x", "w2f", "w34", "w56d", "bias"]
    weights = [packed[n] for n in weight_names]

    x_spec = pl.BlockSpec((bt, x.shape[1]), lambda i: (i, 0))
    w_specs = [pl.BlockSpec(w.shape, lambda i: (0, 0)) for w in weights]  # resident
    out_spec = pl.BlockSpec((bt, ow), lambda i: (i, 0))

    out = pl.pallas_call(
        functools.partial(_net_kernel, num_action=num_action),
        out_shape=jax.ShapeDtypeStruct((B, ow), jnp.float32),
        grid=grid,
        in_specs=[x_spec] + w_specs,
        out_specs=out_spec,
        compiler_params=pltpu.CompilerParams(
            dimension_semantics=("parallel",),
            vmem_limit_bytes=vmem_limit),
    )(x, *weights)

    return out[:, :num_action], out[:, num_action:num_action + 2]


# ---------------------------------------------------------------------------
# Pure-JAX reference (mirrors the torch forward exactly)
# ---------------------------------------------------------------------------
def net_forward_ref(params, x, num_action=NUM_ACTION):
    loc = x[:, 0:5]
    xij = x[:, 5:].reshape(-1, 2)                       # (2B, 2)
    h = jax.nn.relu(xij @ params["w1"] + params["b1"])  # (2B, 128)
    me = (h[0::2] + h[1::2]) / 2.0
    me = jnp.hstack((me, me)).reshape(-1, me.shape[1])  # (2B, 128)
    key = jax.nn.relu(h @ params["wk"] + params["bk"])  # (2B, 64)
    loc2 = jnp.hstack((loc, loc)).reshape(-1, loc.shape[1])
    att_in = jnp.hstack((key, me, loc2))                # (2B, 197)
    sc = att_in @ params["wa"] + params["ba"]           # (2B, 1)
    a = jax.nn.softmax(sc.reshape(-1, 2), axis=1).reshape(-1, 1)
    temp = a * h
    weighted = temp[0::2] + temp[1::2]
    net_in = jnp.hstack((loc, weighted))
    hh = jax.nn.relu(net_in @ params["w2"] + params["b2"])
    adv = jax.nn.relu(hh @ params["w3"] + params["b3"]) @ params["w5"] + params["b5"]
    sv = jax.nn.relu(hh @ params["w4"] + params["b4"]) @ params["w6"] + params["b6"]
    q = sv + adv - jnp.mean(adv, axis=1, keepdims=True)
    return q, a.reshape(-1, 2)


if __name__ == "__main__":
    B = 4
    key = jax.random.PRNGKey(0)
    k_param, k_x = jax.random.split(key)
    params = init_params(k_param)
    x = jax.random.normal(k_x, (B, 9), jnp.float32)

    q_ref, attn_ref = net_forward_ref(params, x)

    # f32 compute path (strict check)
    packed_f32 = pack_params(params, compute_dtype=jnp.float32)
    q, attn = jax.block_until_ready(net_forward(packed_f32, x))
    assert q.shape == (B, NUM_ACTION) and attn.shape == (B, 2)
    assert jnp.allclose(q, q_ref, atol=1e-3, rtol=1e-2)
    assert jnp.allclose(attn, attn_ref, atol=1e-4, rtol=1e-3)

    # default (bf16 matmul operands, f32 accumulation / softmax / dueling)
    packed_bf16 = pack_params(params)
    qb, attnb = jax.block_until_ready(net_forward(packed_bf16, x))
    assert jnp.allclose(qb, q_ref, atol=1e-1, rtol=1.5e-1)
    assert jnp.allclose(attnb, attn_ref, atol=5e-2, rtol=1e-1)

    print("KERNEL_OK")
</pallas_src>

<mosaic_0001>
module attributes {stable_mosaic.version = 11 : i64} {
  func.func @_net_kernel(%arg0: i32, %arg1: memref<4x9xf32, #tpu.memory_space<vmem>>, %arg2: memref<4x256xf32, #tpu.memory_space<vmem>>, %arg3: memref<256x128xf32, #tpu.memory_space<vmem>>, %arg4: memref<9x128xf32, #tpu.memory_space<vmem>>, %arg5: memref<128x128xf32, #tpu.memory_space<vmem>>, %arg6: memref<128x128xf32, #tpu.memory_space<vmem>>, %arg7: memref<128x8xf32, #tpu.memory_space<vmem>>, %arg8: memref<8x256xf32, #tpu.memory_space<vmem>>, %arg9: memref<4x8xf32, #tpu.memory_space<vmem>>) attributes {dimension_semantics = [#tpu.dimension_semantics<parallel>], iteration_bounds = array<i64: 1>, scalar_prefetch = 0 : i64, scratch_operands = 0 : i64, tpu.core_type = #tpu.core_type<tc>, window_params = [{transform_indices = @transform_0, window_bounds = array<i64: 4, 9>}, {pipeline_mode = #tpu.pipeline_mode<synchronous>, transform_indices = @transform_1, window_bounds = array<i64: 4, 256>}, {pipeline_mode = #tpu.pipeline_mode<synchronous>, transform_indices = @transform_2, window_bounds = array<i64: 256, 128>}, {pipeline_mode = #tpu.pipeline_mode<synchronous>, transform_indices = @transform_3, window_bounds = array<i64: 9, 128>}, {pipeline_mode = #tpu.pipeline_mode<synchronous>, transform_indices = @transform_4, window_bounds = array<i64: 128, 128>}, {pipeline_mode = #tpu.pipeline_mode<synchronous>, transform_indices = @transform_5, window_bounds = array<i64: 128, 128>}, {pipeline_mode = #tpu.pipeline_mode<synchronous>, transform_indices = @transform_6, window_bounds = array<i64: 128, 8>}, {pipeline_mode = #tpu.pipeline_mode<synchronous>, transform_indices = @transform_7, window_bounds = array<i64: 8, 256>}, {transform_indices = @transform_8, window_bounds = array<i64: 4, 8>}]} {
    %c0 = arith.constant 0 : index
    %c0_0 = arith.constant 0 : index
    %0 = vector.load %arg1[%c0, %c0_0] : memref<4x9xf32, #tpu.memory_space<vmem>>, vector<4x9xf32>
    %1 = vector.extract_strided_slice %0 {offsets = [0, 5], sizes = [4, 4], strides = [1, 1]} : vector<4x9xf32> to vector<4x4xf32>
    %c0_1 = arith.constant 0 : index
    %c0_2 = arith.constant 0 : index
    %2 = vector.load %arg8[%c0_1, %c0_2] : memref<8x256xf32, #tpu.memory_space<vmem>>, vector<1x256xf32>
    %c1 = arith.constant 1 : index
    %c0_3 = arith.constant 0 : index
    %3 = vector.load %arg8[%c1, %c0_3] : memref<8x256xf32, #tpu.memory_space<vmem>>, vector<1x128xf32>
    %c2 = arith.constant 2 : index
    %c0_4 = arith.constant 0 : index
    %4 = vector.load %arg8[%c2, %c0_4] : memref<8x256xf32, #tpu.memory_space<vmem>>, vector<1x128xf32>
    %c3 = arith.constant 3 : index
    %c0_5 = arith.constant 0 : index
    %5 = vector.load %arg8[%c3, %c0_5] : memref<8x256xf32, #tpu.memory_space<vmem>>, vector<1x9xf32>
    %c4 = arith.constant 4 : index
    %c0_6 = arith.constant 0 : index
    %6 = vector.load %arg8[%c4, %c0_6] : memref<8x256xf32, #tpu.memory_space<vmem>>, vector<1x128xf32>
    %c5 = arith.constant 5 : index
    %c0_7 = arith.constant 0 : index
    %7 = vector.load %arg8[%c5, %c0_7] : memref<8x256xf32, #tpu.memory_space<vmem>>, vector<1x128xf32>
    %c6 = arith.constant 6 : index
    %c0_8 = arith.constant 0 : index
    %8 = vector.load %arg8[%c6, %c0_8] : memref<8x256xf32, #tpu.memory_space<vmem>>, vector<1x8xf32>
    %c7 = arith.constant 7 : index
    %c0_9 = arith.constant 0 : index
    %9 = vector.load %arg8[%c7, %c0_9] : memref<8x256xf32, #tpu.memory_space<vmem>>, vector<1x128xf32>
    %c7_10 = arith.constant 7 : index
    %c128 = arith.constant 128 : index
    %10 = vector.load %arg8[%c7_10, %c128] : memref<8x256xf32, #tpu.memory_space<vmem>>, vector<1x1xf32>
    %c0_11 = arith.constant 0 : index
    %c0_12 = arith.constant 0 : index
    %11 = vector.load %arg2[%c0_11, %c0_12] : memref<4x256xf32, #tpu.memory_space<vmem>>, vector<4x256xf32>
    %cst = arith.constant dense<0.000000e+00> : vector<4x256xf32>
    %12 = tpu.matmul %1, %11, %cst {dimension_numbers = #tpu.dot_dimension_numbers<[1], [0], [0], [1], [0, 0, 1, 1], [], []>} : vector<4x4xf32>, vector<4x256xf32>, vector<4x256xf32> -> vector<4x256xf32>
    %13 = vector.broadcast %2 : vector<1x256xf32> to vector<4x256xf32>
    %14 = arith.addf %12, %13 : vector<4x256xf32>
    %cst_13 = arith.constant 0.000000e+00 : f32
    %15 = vector.broadcast %cst_13 : f32 to vector<4x256xf32>
    %16 = arith.maximumf %14, %15 : vector<4x256xf32>
    %17 = vector.extract_strided_slice %16 {offsets = [0, 0], sizes = [4, 128], strides = [1, 1]} : vector<4x256xf32> to vector<4x128xf32>
    %18 = vector.extract_strided_slice %16 {offsets = [0, 128], sizes = [4, 128], strides = [1, 1]} : vector<4x256xf32> to vector<4x128xf32>
    %19 = arith.addf %17, %18 : vector<4x128xf32>
    %cst_14 = arith.constant 5.000000e-01 : f32
    %20 = vector.broadcast %cst_14 : f32 to vector<4x128xf32>
    %21 = arith.mulf %19, %20 : vector<4x128xf32>
    %c0_15 = arith.constant 0 : index
    %c0_16 = arith.constant 0 : index
    %22 = vector.load %arg3[%c0_15, %c0_16] : memref<256x128xf32, #tpu.memory_space<vmem>>, vector<256x128xf32>
    %cst_17 = arith.constant dense<0.000000e+00> : vector<4x128xf32>
    %23 = tpu.matmul %16, %22, %cst_17 {dimension_numbers = #tpu.dot_dimension_numbers<[1], [0], [0], [1], [0, 0, 1, 1], [], []>} : vector<4x256xf32>, vector<256x128xf32>, vector<4x128xf32> -> vector<4x128xf32>
    %24 = vector.broadcast %3 : vector<1x128xf32> to vector<4x128xf32>
    %25 = arith.addf %23, %24 : vector<4x128xf32>
    %cst_18 = arith.constant 0.000000e+00 : f32
    %26 = vector.broadcast %cst_18 : f32 to vector<4x128xf32>
    %27 = arith.maximumf %25, %26 : vector<4x128xf32>
    %28 = vector.broadcast %4 : vector<1x128xf32> to vector<4x128xf32>
    %29 = arith.mulf %21, %28 : vector<4x128xf32>
    %cst_19 = arith.constant dense<0.000000e+00> : vector<4xf32>
    %30 = vector.multi_reduction <add>, %29, %cst_19 [1] : vector<4x128xf32> to vector<4xf32>
    %31 = vector.shape_cast %30 : vector<4xf32> to vector<4x1xf32>
    %32 = vector.broadcast %5 : vector<1x9xf32> to vector<4x9xf32>
    %33 = arith.mulf %0, %32 : vector<4x9xf32>
    %cst_20 = arith.constant dense<0.000000e+00> : vector<4xf32>
    %34 = vector.multi_reduction <add>, %33, %cst_20 [1] : vector<4x9xf32> to vector<4xf32>
    %35 = vector.shape_cast %34 : vector<4xf32> to vector<4x1xf32>
    %36 = arith.addf %31, %35 : vector<4x1xf32>
    %37 = vector.broadcast %10 : vector<1x1xf32> to vector<4x1xf32>
    %38 = arith.addf %36, %37 : vector<4x1xf32>
    %39 = vector.broadcast %9 : vector<1x128xf32> to vector<4x128xf32>
    %40 = arith.mulf %27, %39 : vector<4x128xf32>
    %41 = vector.extract_strided_slice %40 {offsets = [0, 0], sizes = [4, 64], strides = [1, 1]} : vector<4x128xf32> to vector<4x64xf32>
    %cst_21 = arith.constant dense<0.000000e+00> : vector<4xf32>
    %42 = vector.multi_reduction <add>, %41, %cst_21 [1] : vector<4x64xf32> to vector<4xf32>
    %43 = vector.shape_cast %42 : vector<4xf32> to vector<4x1xf32>
    %44 = vector.extract_strided_slice %40 {offsets = [0, 64], sizes = [4, 64], strides = [1, 1]} : vector<4x128xf32> to vector<4x64xf32>
    %cst_22 = arith.constant dense<0.000000e+00> : vector<4xf32>
    %45 = vector.multi_reduction <add>, %44, %cst_22 [1] : vector<4x64xf32> to vector<4xf32>
    %46 = vector.shape_cast %45 : vector<4xf32> to vector<4x1xf32>
    %47 = tpu.concatenate %43, %46 in 1 : vector<4x1xf32>, vector<4x1xf32> -> vector<4x2xf32>
    %48 = vector.broadcast %38 : vector<4x1xf32> to vector<4x2xf32>
    %49 = arith.addf %47, %48 : vector<4x2xf32>
    %cst_23 = arith.constant dense<0xFF800000> : vector<4xf32>
    %50 = vector.multi_reduction <maximumf>, %49, %cst_23 [1] : vector<4x2xf32> to vector<4xf32>
    %51 = vector.shape_cast %50 : vector<4xf32> to vector<4x1xf32>
    %52 = vector.broadcast %51 : vector<4x1xf32> to vector<4x2xf32>
    %53 = arith.subf %49, %52 : vector<4x2xf32>
    %54 = math.exp %53 : vector<4x2xf32>
    %cst_24 = arith.constant dense<0.000000e+00> : vector<4xf32>
    %55 = vector.multi_reduction <add>, %54, %cst_24 [1] : vector<4x2xf32> to vector<4xf32>
    %56 = vector.shape_cast %55 : vector<4xf32> to vector<4x1xf32>
    %57 = vector.broadcast %56 : vector<4x1xf32> to vector<4x2xf32>
    %58 = arith.divf %54, %57 : vector<4x2xf32>
    %59 = vector.extract_strided_slice %58 {offsets = [0, 0], sizes = [4, 1], strides = [1, 1]} : vector<4x2xf32> to vector<4x1xf32>
    %60 = vector.broadcast %59 : vector<4x1xf32> to vector<4x128xf32>
    %61 = arith.mulf %60, %17 : vector<4x128xf32>
    %62 = vector.extract_strided_slice %58 {offsets = [0, 1], sizes = [4, 1], strides = [1, 1]} : vector<4x2xf32> to vector<4x1xf32>
    %63 = vector.broadcast %62 : vector<4x1xf32> to vector<4x128xf32>
    %64 = arith.mulf %63, %18 : vector<4x128xf32>
    %65 = arith.addf %61, %64 : vector<4x128xf32>
    %c0_25 = arith.constant 0 : index
    %c0_26 = arith.constant 0 : index
    %66 = vector.load %arg4[%c0_25, %c0_26] : memref<9x128xf32, #tpu.memory_space<vmem>>, vector<9x128xf32>
    %cst_27 = arith.constant dense<0.000000e+00> : vector<4x128xf32>
    %67 = tpu.matmul %0, %66, %cst_27 {dimension_numbers = #tpu.dot_dimension_numbers<[1], [0], [0], [1], [0, 0, 1, 1], [], []>} : vector<4x9xf32>, vector<9x128xf32>, vector<4x128xf32> -> vector<4x128xf32>
    %c0_28 = arith.constant 0 : index
    %c0_29 = arith.constant 0 : index
    %68 = vector.load %arg5[%c0_28, %c0_29] : memref<128x128xf32, #tpu.memory_space<vmem>>, vector<128x128xf32>
    %cst_30 = arith.constant dense<0.000000e+00> : vector<4x128xf32>
    %69 = tpu.matmul %65, %68, %cst_30 {dimension_numbers = #tpu.dot_dimension_numbers<[1], [0], [0], [1], [0, 0, 1, 1], [], []>} : vector<4x128xf32>, vector<128x128xf32>, vector<4x128xf32> -> vector<4x128xf32>
    %70 = arith.addf %67, %69 : vector<4x128xf32>
    %71 = vector.broadcast %6 : vector<1x128xf32> to vector<4x128xf32>
    %72 = arith.addf %70, %71 : vector<4x128xf32>
    %cst_31 = arith.constant 0.000000e+00 : f32
    %73 = vector.broadcast %cst_31 : f32 to vector<4x128xf32>
    %74 = arith.maximumf %72, %73 : vector<4x128xf32>
    %c0_32 = arith.constant 0 : index
    %c0_33 = arith.constant 0 : index
    %75 = vector.load %arg6[%c0_32, %c0_33] : memref<128x128xf32, #tpu.memory_space<vmem>>, vector<128x128xf32>
    %cst_34 = arith.constant dense<0.000000e+00> : vector<4x128xf32>
    %76 = tpu.matmul %74, %75, %cst_34 {dimension_numbers = #tpu.dot_dimension_numbers<[1], [0], [0], [1], [0, 0, 1, 1], [], []>} : vector<4x128xf32>, vector<128x128xf32>, vector<4x128xf32> -> vector<4x128xf32>
    %77 = vector.broadcast %7 : vector<1x128xf32> to vector<4x128xf32>
    %78 = arith.addf %76, %77 : vector<4x128xf32>
    %cst_35 = arith.constant 0.000000e+00 : f32
    %79 = vector.broadcast %cst_35 : f32 to vector<4x128xf32>
    %80 = arith.maximumf %78, %79 : vector<4x128xf32>
    %c0_36 = arith.constant 0 : index
    %c0_37 = arith.constant 0 : index
    %81 = vector.load %arg7[%c0_36, %c0_37] : memref<128x8xf32, #tpu.memory_space<vmem>>, vector<128x8xf32>
    %cst_38 = arith.constant dense<0.000000e+00> : vector<4x8xf32>
    %82 = tpu.matmul %80, %81, %cst_38 {dimension_numbers = #tpu.dot_dimension_numbers<[1], [0], [0], [1], [0, 0, 1, 1], [], []>} : vector<4x128xf32>, vector<128x8xf32>, vector<4x8xf32> -> vector<4x8xf32>
    %83 = vector.broadcast %8 : vector<1x8xf32> to vector<4x8xf32>
    %84 = arith.addf %82, %83 : vector<4x8xf32>
    %85 = vector.extract_strided_slice %84 {offsets = [0, 0], sizes = [4, 5], strides = [1, 1]} : vector<4x8xf32> to vector<4x5xf32>
    %86 = vector.extract_strided_slice %84 {offsets = [0, 5], sizes = [4, 1], strides = [1, 1]} : vector<4x8xf32> to vector<4x1xf32>
    %87 = vector.broadcast %86 : vector<4x1xf32> to vector<4x5xf32>
    %88 = arith.addf %87, %85 : vector<4x5xf32>
    %cst_39 = arith.constant dense<0.000000e+00> : vector<4xf32>
    %89 = vector.multi_reduction <add>, %85, %cst_39 [1] : vector<4x5xf32> to vector<4xf32>
    %90 = vector.shape_cast %89 : vector<4xf32> to vector<4x1xf32>
    %cst_40 = arith.constant 5.000000e+00 : f32
    %91 = vector.broadcast %cst_40 : f32 to vector<4x1xf32>
    %92 = arith.divf %90, %91 : vector<4x1xf32>
    %93 = vector.broadcast %92 : vector<4x1xf32> to vector<4x5xf32>
    %94 = arith.subf %88, %93 : vector<4x5xf32>
    %cst_41 = arith.constant 0.000000e+00 : f32
    %95 = vector.broadcast %cst_41 : f32 to vector<4x1xf32>
    %96 = tpu.concatenate %94, %58, %95 in 1 : vector<4x5xf32>, vector<4x2xf32>, vector<4x1xf32> -> vector<4x8xf32>
    %c0_42 = arith.constant 0 : index
    %c0_43 = arith.constant 0 : index
    %97 = vector.load %arg9[%c0_42, %c0_43] : memref<4x8xf32, #tpu.memory_space<vmem>>, vector<4x8xf32>
    tpu.vector_store %arg9[%c0_42, %c0_43], %96 {strides = array<i32>} : memref<4x8xf32, #tpu.memory_space<vmem>>, vector<4x8xf32>,
    return
  }
  func.func @transform_0(%arg0: i32) -> (i32, i32) {
    %c0_i32 = arith.constant 0 : i32
    %c0_i32_0 = arith.constant 0 : i32
    return %arg0, %c0_i32 : i32, i32
  }
  func.func @transform_1(%arg0: i32) -> (i32, i32) {
    %c0_i32 = arith.constant 0 : i32
    %c0_i32_0 = arith.constant 0 : i32
    %c0_i32_1 = arith.constant 0 : i32
    return %c0_i32, %c0_i32_0 : i32, i32
  }
  func.func @transform_2(%arg0: i32) -> (i32, i32) {
    %c0_i32 = arith.constant 0 : i32
    %c0_i32_0 = arith.constant 0 : i32
    %c0_i32_1 = arith.constant 0 : i32
    return %c0_i32, %c0_i32_0 : i32, i32
  }
  func.func @transform_3(%arg0: i32) -> (i32, i32) {
    %c0_i32 = arith.constant 0 : i32
    %c0_i32_0 = arith.constant 0 : i32
    %c0_i32_1 = arith.constant 0 : i32
    return %c0_i32, %c0_i32_0 : i32, i32
  }
  func.func @transform_4(%arg0: i32) -> (i32, i32) {
    %c0_i32 = arith.constant 0 : i32
    %c0_i32_0 = arith.constant 0 : i32
    %c0_i32_1 = arith.constant 0 : i32
    return %c0_i32, %c0_i32_0 : i32, i32
  }
  func.func @transform_5(%arg0: i32) -> (i32, i32) {
    %c0_i32 = arith.constant 0 : i32
    %c0_i32_0 = arith.constant 0 : i32
    %c0_i32_1 = arith.constant 0 : i32
    return %c0_i32, %c0_i32_0 : i32, i32
  }
  func.func @transform_6(%arg0: i32) -> (i32, i32) {
    %c0_i32 = arith.constant 0 : i32
    %c0_i32_0 = arith.constant 0 : i32
    %c0_i32_1 = arith.constant 0 : i32
    return %c0_i32, %c0_i32_0 : i32, i32
  }
  func.func @transform_7(%arg0: i32) -> (i32, i32) {
    %c0_i32 = arith.constant 0 : i32
    %c0_i32_0 = arith.constant 0 : i32
    %c0_i32_1 = arith.constant 0 : i32
    return %c0_i32, %c0_i32_0 : i32, i32
  }
  func.func @transform_8(%arg0: i32) -> (i32, i32) {
    %c0_i32 = arith.constant 0 : i32
    %c0_i32_0 = arith.constant 0 : i32
    return %arg0, %c0_i32 : i32, i32
  }
}

</mosaic_0001>

<llo_original>
// kernel: tpu_custom_call.1
$region0: #{tpu_custom_call.1}
  #allocation0 [shape = 'u32[]', space=smem, size = 0x4, offset = 0x4, fixed_abs, tag = 'smem constant byte address 0x4 - core index']
  #allocation1 [shape = 'u32[72,128]{1,0:T(1,128)}', space=vmem, size = 0x9000, scoped, tag = 'internal scratch']
  %s0 = inlined_call_operand.hbm [shape: f32[4,9], index: 0, kind: input, shape index: {}]
  %s1 = inlined_call_operand.vmem [shape: f32[4,256], index: 1, kind: input, shape index: {}]
  %s2 = inlined_call_operand.hbm [shape: f32[256,128], index: 2, kind: input, shape index: {}]
  %s3 = inlined_call_operand.hbm [shape: f32[9,128], index: 3, kind: input, shape index: {}]
  %s4 = inlined_call_operand.vmem [shape: f32[128,128], index: 4, kind: input, shape index: {}]
  %s5 = inlined_call_operand.hbm [shape: f32[128,128], index: 5, kind: input, shape index: {}]
  %s6 = inlined_call_operand.vmem [shape: f32[128,8], index: 6, kind: input, shape index: {}]
  %s7 = inlined_call_operand.hbm [shape: f32[8,256], index: 7, kind: input, shape index: {}]
  %s8 = inlined_call_operand.hbm [shape: f32[4,8], index: 8, kind: output, shape index: {}]
  %s9 = sld [smem:[#allocation0]]
  $region62: #{tpu_custom_call.1} parent=0
    _
  %s11 = ssub.s32 1, %s9
  %s12 = scalar_select 0, %s11, %s9
  $region1: #{tpu_custom_call.1} parent=0
    #allocation2 [shape = 'u8[2048]{0}', space=vmem, size = 0x800, scoped, tag = 'input window, operand 0, single buffered']
    #allocation3 [shape = 's32[1]{0}', space=sflag, size = 0x4, scoped, tag = 'scoped memory for tpu_custom_call.1']
    #allocation4 [shape = 's32[1]{0}', space=sflag, size = 0x4, scoped, tag = 'scoped memory for tpu_custom_call.1']
    #allocation5 [shape = 'u8[131072]{0}', space=vmem, size = 0x20000, scoped, tag = 'input window, operand 2, single buffered']
    #allocation6 [shape = 's32[1]{0}', space=sflag, size = 0x4, scoped, tag = 'scoped memory for tpu_custom_call.1']
    #allocation7 [shape = 'u8[8192]{0}', space=vmem, size = 0x2000, scoped, tag = 'input window, operand 3, single buffered']
    #allocation8 [shape = 'u8[65536]{0}', space=vmem, size = 0x10000, scoped, tag = 'input window, operand 5, single buffered']
    #allocation9 [shape = 's32[1]{0}', space=sflag, size = 0x4, scoped, tag = 'scoped memory for tpu_custom_call.1']
    #allocation10 [shape = 'u8[8192]{0}', space=vmem, size = 0x2000, scoped, tag = 'input window, operand 7, single buffered']
    #allocation11 [shape = 'u8[2048]{0}', space=vmem, size = 0x800, scoped, tag = 'output window, operand 0, single buffered']
    %13 = vsyncpa [#allocation3], 0
    %14 = vsyncpa [#allocation6], 0
    %15 = vsyncpa [#allocation9], 0
    %16 = vsyncpa [#allocation4], 0
    // Predicated region
    $region2: #{tpu_custom_call.1} parent=1 // pred_check
      _
    $region3: #{tpu_custom_call.1} parent=1 // pred_check_branch
      %18 = sbr.rel (0) target = $region5
    $region4: #{tpu_custom_call.1} parent=1 // pred_region
      %20 = vsyncadd [#allocation3], 0
      %s22 = sshll.u32 %s0, 4
      %s23 = int_to_ptr.hbm [resolvable:$true] %s22
      %s24 = sshll.u32 [#allocation2], 4
      %s25 = int_to_ptr.vmem [resolvable:$true] %s24
      %27 = dma.hbm_to_vmem [thread:$0]  %s23, 64, %s25, [#allocation3]
    $region5: #{tpu_custom_call.1} parent=1 // pred_fallthru
      _
    // Predicated region
    $region6: #{tpu_custom_call.1} parent=1 // pred_check
      _
    $region7: #{tpu_custom_call.1} parent=1 // pred_check_branch
      %29 = sbr.rel (0) target = $region9
    $region8: #{tpu_custom_call.1} parent=1 // pred_region
      _
    $region9: #{tpu_custom_call.1} parent=1 // pred_fallthru
      _
    // Predicated region
    $region10: #{tpu_custom_call.1} parent=1 // pred_check
      _
    $region11: #{tpu_custom_call.1} parent=1 // pred_check_branch
      %31 = sbr.rel (0) target = $region13
    $region12: #{tpu_custom_call.1} parent=1 // pred_region
      %33 = vsyncadd [#allocation6], 0
      %s34 = sshll.u32 %s2, 4
      %s35 = int_to_ptr.hbm [resolvable:$true] %s34
      %s36 = sshll.u32 [#allocation5], 4
      %s37 = int_to_ptr.vmem [resolvable:$true] %s36
      %42 = dma.hbm_to_vmem [thread:$0]  %s35, 4096, %s37, [#allocation6], 128, 128, 8
    $region13: #{tpu_custom_call.1} parent=1 // pred_fallthru
      _
    // Predicated region
    $region14: #{tpu_custom_call.1} parent=1 // pred_check
      _
    $region15: #{tpu_custom_call.1} parent=1 // pred_check_branch
      %44 = sbr.rel (0) target = $region17
    $region16: #{tpu_custom_call.1} parent=1 // pred_region
      %46 = vsyncadd [#allocation6], 0
      %s47 = sshll.u32 %s3, 4
      %s48 = int_to_ptr.hbm [resolvable:$true] %s47
      %s49 = sshll.u32 [#allocation7], 4
      %s50 = int_to_ptr.vmem [resolvable:$true] %s49
      %55 = dma.hbm_to_vmem [thread:$0]  %s48, 256, %s50, [#allocation6], 128, 128, 8
    $region17: #{tpu_custom_call.1} parent=1 // pred_fallthru
      _
    // Predicated region
    $region18: #{tpu_custom_call.1} parent=1 // pred_check
      _
    $region19: #{tpu_custom_call.1} parent=1 // pred_check_branch
      %57 = sbr.rel (0) target = $region21
    $region20: #{tpu_custom_call.1} parent=1 // pred_region
      _
    $region21: #{tpu_custom_call.1} parent=1 // pred_fallthru
      _
    // Predicated region
    $region22: #{tpu_custom_call.1} parent=1 // pred_check
      _
    $region23: #{tpu_custom_call.1} parent=1 // pred_check_branch
      %59 = sbr.rel (0) target = $region25
    $region24: #{tpu_custom_call.1} parent=1 // pred_region
      %61 = vsyncadd [#allocation9], 0
      %s62 = sshll.u32 %s5, 4
      %s63 = int_to_ptr.hbm [resolvable:$true] %s62
      %s64 = sshll.u32 [#allocation8], 4
      %s65 = int_to_ptr.vmem [resolvable:$true] %s64
      %70 = dma.hbm_to_vmem [thread:$0]  %s63, 2048, %s65, [#allocation9], 128, 128, 8
    $region25: #{tpu_custom_call.1} parent=1 // pred_fallthru
      _
    // Predicated region
    $region26: #{tpu_custom_call.1} parent=1 // pred_check
      _
    $region27: #{tpu_custom_call.1} parent=1 // pred_check_branch
      %72 = sbr.rel (0) target = $region29
    $region28: #{tpu_custom_call.1} parent=1 // pred_region
      _
    $region29: #{tpu_custom_call.1} parent=1 // pred_fallthru
      _
    // Predicated region
    $region30: #{tpu_custom_call.1} parent=1 // pred_check
      _
    $region31: #{tpu_custom_call.1} parent=1 // pred_check_branch
      %74 = sbr.rel (0) target = $region33
    $region32: #{tpu_custom_call.1} parent=1 // pred_region
      %76 = vsyncadd [#allocation9], 0
      %s78 = sshll.u32 %s7, 4
      %s79 = int_to_ptr.hbm [resolvable:$true] %s78
      %s80 = sshll.u32 [#allocation10], 4
      %s81 = int_to_ptr.vmem [resolvable:$true] %s80
      %83 = dma.hbm_to_vmem [thread:$0]  %s79, 256, %s81, [#allocation9]
    $region33: #{tpu_custom_call.1} parent=1 // pred_fallthru
      _
    // Predicated region
    $region34: #{tpu_custom_call.1} parent=1 // pred_check
      _
    $region35: #{tpu_custom_call.1} parent=1 // pred_check_branch
      %85 = sbr.rel (0) target = $region37
    $region36: #{tpu_custom_call.1} parent=1 // pred_region
      %87 = dma.done [#allocation3], 64
    $region37: #{tpu_custom_call.1} parent=1 // pred_fallthru
      _
    // Predicated region
    $region38: #{tpu_custom_call.1} parent=1 // pred_check
      _
    $region39: #{tpu_custom_call.1} parent=1 // pred_check_branch
      %89 = sbr.rel (0) target = $region41
    $region40: #{tpu_custom_call.1} parent=1 // pred_region
      %91 = dma.done [#allocation6], 4096
    $region41: #{tpu_custom_call.1} parent=1 // pred_fallthru
      _
    // Predicated region
    $region42: #{tpu_custom_call.1} parent=1 // pred_check
      _
    $region43: #{tpu_custom_call.1} parent=1 // pred_check_branch
      %93 = sbr.rel (0) target = $region45
    $region44: #{tpu_custom_call.1} parent=1 // pred_region
      %95 = dma.done [#allocation6], 256
    $region45: #{tpu_custom_call.1} parent=1 // pred_fallthru
      _
    // Predicated region
    $region46: #{tpu_custom_call.1} parent=1 // pred_check
      _
    $region47: #{tpu_custom_call.1} parent=1 // pred_check_branch
      %97 = sbr.rel (0) target = $region49
    $region48: #{tpu_custom_call.1} parent=1 // pred_region
      %99 = dma.done [#allocation9], 2048
    $region49: #{tpu_custom_call.1} parent=1 // pred_fallthru
      _
    // Predicated region
    $region50: #{tpu_custom_call.1} parent=1 // pred_check
      _
    $region51: #{tpu_custom_call.1} parent=1 // pred_check_branch
      %101 = sbr.rel (0) target = $region53
    $region52: #{tpu_custom_call.1} parent=1 // pred_region
      %103 = dma.done [#allocation9], 256
    $region53: #{tpu_custom_call.1} parent=1 // pred_fallthru
      _
    %v104 = vld [vmem:[#allocation2] sm:$0xf]
    %v105 = vld [vmem:[#allocation10] ss:$8 sm:$0x3]
    %v106 = vld [vmem:[#allocation10 + $0x1] ss:$0 sm:$0xff]
    %v107 = vld [vmem:[#allocation10 + $0x2] ss:$0 sm:$0xff]
    %v108 = vld [vmem:[#allocation10 + $0x3] ss:$0 sm:$0xff]
    %v109 = vld [vmem:[#allocation10 + $0x4] ss:$0 sm:$0xff]
    %v110 = vld [vmem:[#allocation10 + $0x5] ss:$0 sm:$0xff]
    %v111 = vld [vmem:[#allocation10 + $0x6] ss:$0 sm:$0xff]
    %v112 = vld [vmem:[#allocation10 + $0x7] ss:$0 sm:$0xff]
    %v113 = vld [vmem:[#allocation10 + $0xf] ss:$0 sm:$0xff]
    %v114 = vld [vmem:[%s1] sm:$0xff]
    %v116 = vperm.slane %v105, 0
    %v117 = vperm.slane %v105, 1
    %121 = vrot.lane.b32.xlu0 %v104, 123
    %v122 = vpop.permute.xlu0 %121
    %124 = vst [vmem:[#allocation1] ss:$2 sm:$0xff] %v114
    %v125 = vld.sshfl [vmem:[#allocation1] sm:$0xff pattern:$0x75316420]
    %v126 = vld.sshfl [vmem:[#allocation1 + $0x8] sm:$0xff pattern:$0x75316420]
    %vm127 = vcmask 31744
    %v128 = vsel %vm127, %v122, 0
    %vm130 = vcmask 1043456
    %v131 = vsel %vm130, %v125, 0
    %v133 = vsel %vm130, %v126, 0
    %135 = vmatpush.msra.mxu0 0.0
    %136 = vmatpush.msra.mxu0 0.0
    %137 = vmatpush.msra.mxu0 0.0
    %138 = vmatpush.msra.mxu0 0.0
    %139 = vmatpush.msra.mxu0 0.0
    %140 = vmatpush.msra.mxu0 0.0
    %141 = vmatpush.msra.mxu0 0.0
    %142 = vmatpush.msra.mxu0 0.0
    %143 = vmatpush.msra.mxu0 0.0
    %144 = vmatpush.msra.mxu0 0.0
    %145 = vmatpush.msra.mxu0 0.0
    %146 = vmatpush.msra.mxu0 0.0
    %147 = vmatpush.msra.mxu0 0.0
    %148 = vmatpush.msra.mxu0 0.0
    %149 = vmatpush.msra.mxu0 0.0
    %150 = vmatpush.msra.mxu0 %v131
    %151 = vmatmul.f32.gmra.mxu0 %v128
    %v152 = vpop.f32.mrf.mxu0
    %v153 = vadd.f32 %v116, %v152
    %154 = vdwg.mxu0
    %155 = vmatpush.msra.mxu0 0.0
    %156 = vmatpush.msra.mxu0 0.0
    %157 = vmatpush.msra.mxu0 0.0
    %158 = vmatpush.msra.mxu0 0.0
    %159 = vmatpush.msra.mxu0 0.0
    %160 = vmatpush.msra.mxu0 0.0
    %161 = vmatpush.msra.mxu0 0.0
    %162 = vmatpush.msra.mxu0 0.0
    %163 = vmatpush.msra.mxu0 0.0
    %164 = vmatpush.msra.mxu0 0.0
    %165 = vmatpush.msra.mxu0 0.0
    %166 = vmatpush.msra.mxu0 0.0
    %167 = vmatpush.msra.mxu0 0.0
    %168 = vmatpush.msra.mxu0 0.0
    %169 = vmatpush.msra.mxu0 0.0
    %170 = vmatpush.msra.mxu0 %v133
    %171 = vmatmul.f32.gmra.mxu0 %v128
    %v172 = vpop.f32.mrf.mxu0
    %v173 = vadd.f32 %v117, %v172
    %174 = vdwg.mxu0
    %v175 = vmax.f32 %v153, 0.0
    %v176 = vmax.f32 %v173, 0.0
    %v177 = vadd.f32 %v175, %v176
    %v178 = vmul.f32 %v177, 0.5
    %v179 = vld [vmem:[#allocation5] sm:$0xff]
    %v180 = vld [vmem:[#allocation5 + $0x8] sm:$0xff]
    %v181 = vld [vmem:[#allocation5 + $0x10] sm:$0xff]
    %v182 = vld [vmem:[#allocation5 + $0x18] sm:$0xff]
    %v183 = vld [vmem:[#allocation5 + $0x20] sm:$0xff]
    %v184 = vld [vmem:[#allocation5 + $0x28] sm:$0xff]
    %v185 = vld [vmem:[#allocation5 + $0x30] sm:$0xff]
    %v186 = vld [vmem:[#allocation5 + $0x38] sm:$0xff]
    %v187 = vld [vmem:[#allocation5 + $0x40] sm:$0xff]
    %v188 = vld [vmem:[#allocation5 + $0x48] sm:$0xff]
    %v189 = vld [vmem:[#allocation5 + $0x50] sm:$0xff]
    %v190 = vld [vmem:[#allocation5 + $0x58] sm:$0xff]
    %v191 = vld [vmem:[#allocation5 + $0x60] sm:$0xff]
    %v192 = vld [vmem:[#allocation5 + $0x68] sm:$0xff]
    %v193 = vld [vmem:[#allocation5 + $0x70] sm:$0xff]
    %v194 = vld [vmem:[#allocation5 + $0x78] sm:$0xff]
    %v195 = vld [vmem:[#allocation5 + $0x80] sm:$0xff]
    %v196 = vld [vmem:[#allocation5 + $0x88] sm:$0xff]
    %v197 = vld [vmem:[#allocation5 + $0x90] sm:$0xff]
    %v198 = vld [vmem:[#allocation5 + $0x98] sm:$0xff]
    %v199 = vld [vmem:[#allocation5 + $0xa0] sm:$0xff]
    %v200 = vld [vmem:[#allocation5 + $0xa8] sm:$0xff]
    %v201 = vld [vmem:[#allocation5 + $0xb0] sm:$0xff]
    %v202 = vld [vmem:[#allocation5 + $0xb8] sm:$0xff]
    %v203 = vld [vmem:[#allocation5 + $0xc0] sm:$0xff]
    %v204 = vld [vmem:[#allocation5 + $0xc8] sm:$0xff]
    %v205 = vld [vmem:[#allocation5 + $0xd0] sm:$0xff]
    %v206 = vld [vmem:[#allocation5 + $0xd8] sm:$0xff]
    %v207 = vld [vmem:[#allocation5 + $0xe0] sm:$0xff]
    %v208 = vld [vmem:[#allocation5 + $0xe8] sm:$0xff]
    %v209 = vld [vmem:[#allocation5 + $0xf0] sm:$0xff]
    %v210 = vld [vmem:[#allocation5 + $0xf8] sm:$0xff]
    %211 = vmatpush.msra.mxu0 %v194
    %212 = vmatpush.msra.mxu0 %v193
    %213 = vmatpush.msra.mxu0 %v192
    %214 = vmatpush.msra.mxu0 %v191
    %215 = vmatpush.msra.mxu0 %v190
    %216 = vmatpush.msra.mxu0 %v189
    %217 = vmatpush.msra.mxu0 %v188
    %218 = vmatpush.msra.mxu0 %v187
    %219 = vmatpush.msra.mxu0 %v186
    %220 = vmatpush.msra.mxu0 %v185
    %221 = vmatpush.msra.mxu0 %v184
    %222 = vmatpush.msra.mxu0 %v183
    %223 = vmatpush.msra.mxu0 %v182
    %224 = vmatpush.msra.mxu0 %v181
    %225 = vmatpush.msra.mxu0 %v180
    %226 = vmatpush.msra.mxu0 %v179
    %227 = vmatmul.f32.gmra.mxu0 %v175
    %v228 = vpop.f32.mrf.mxu0
    %v229 = vadd.f32 %v106, %v228
    %230 = vdwg.mxu0
    %231 = vmatpush.msra.mxu0 %v210
    %232 = vmatpush.msra.mxu0 %v209
    %233 = vmatpush.msra.mxu0 %v208
    %234 = vmatpush.msra.mxu0 %v207
    %235 = vmatpush.msra.mxu0 %v206
    %236 = vmatpush.msra.mxu0 %v205
    %237 = vmatpush.msra.mxu0 %v204
    %238 = vmatpush.msra.mxu0 %v203
    %239 = vmatpush.msra.mxu0 %v202
    %240 = vmatpush.msra.mxu0 %v201
    %241 = vmatpush.msra.mxu0 %v200
    %242 = vmatpush.msra.mxu0 %v199
    %243 = vmatpush.msra.mxu0 %v198
    %244 = vmatpush.msra.mxu0 %v197
    %245 = vmatpush.msra.mxu0 %v196
    %246 = vmatpush.msra.mxu0 %v195
    %247 = vmatmul.f32.gmra.mxu0 %v176
    %v248 = vpop.f32.mrf.mxu0
    %v249 = vadd.f32 %v229, %v248
    %250 = vdwg.mxu0
    %v251 = vmax.f32 %v249, 0.0
    %v252 = vmul.f32 %v178, %v107
    %v253 = vsel %vm130, %v252, 0.0
    %254 = vadd.xlane.f32.xlu0 %v253
    %v255 = vpop.xlane.xlu0 %254
    %v256 = vmul.f32 %v104, %v108
    %vm257 = vcmask 68608
    %v258 = vsel %vm257, %v256, 0.0
    %259 = vadd.xlane.f32.xlu0 %v258
    %v260 = vpop.xlane.xlu0 %259
    %v261 = vadd.f32 %v255, %v260
    %v262 = vadd.f32 %v261, %v113
    %v263 = vmul.f32 %v251, %v112
    %vm264 = vcmask 519168
    %v265 = vsel %vm264, %v263, 0.0
    %266 = vadd.xlane.f32.xlu0 %v265
    %v267 = vpop.xlane.xlu0 %266
    %269 = vrot.lane.b32.xlu0 %v263, 64
    %v270 = vpop.permute.xlu0 %269
    %v272 = vsel %vm264, %v270, 0.0
    %273 = vadd.xlane.f32.xlu0 %v272
    %v274 = vpop.xlane.xlu0 %273
    %vm275 = vcmask 7168
    %v276 = vsel %vm275, %v267, %v274
    %278 = vset.pattern.permute.xlu0 0
    %279 = vperm.xlu0 %278, %v262
    %v280 = vpop.permute.xlu0 %279
    %v282 = vadd.f32 %v276, %v280
    %vm283 = vcmask 11264
    %v284 = vsel %vm283, %v282, -inf
    %285 = vmax.xlane.f32.xlu0 %v284
    %v286 = vpop.xlane.xlu0 %285
    %v287 = vsub.f32 %v282, %v286
    %v288 = vmul.f32 %v287, 1.442695
    %v289 = vpow.pop %v288
    %v290 = vsel %vm283, %v289, 0.0
    %291 = vadd.xlane.f32.xlu0 %v290
    %v292 = vpop.xlane.xlu0 %291
    %v293 = vrcp.pop %v292
    %v294 = vmul.f32 %v292, %v293
    %v295 = vsub.f32 1.0, %v294
    %v296 = vmul.f32 %v293, %v295
    %v297 = vadd.f32 %v293, %v296
    %vm298 = vweird.f32 %v292
    %vm299 = vweird.f32 %v293
    %vm300 = vmor %vm298, %vm299
    %v301 = vsel %vm300, %v293, %v297
    %v302 = vand.u32 2147483647, %v292
    %vm303 = vcmp.eq.f32.partialorder %v302, 8.507059e+37
    %v304 = vand.u32 %v292, 2147483648
    %v305 = vor.u32 1.1754944e-38, %v304
    %v306 = vsel %vm303, %v305, %v301
    %v307 = vmul.f32 %v289, %v306
    %309 = vset.pattern.permute.xlu0 0
    %310 = vperm.xlu0 %309, %v307
    %v311 = vpop.permute.xlu0 %310
    %v313 = vmul.f32 %v311, %v175
    %314 = vset.pattern.permute.xlu0 1
    %315 = vperm.xlu0 %314, %v307
    %v316 = vpop.permute.xlu0 %315
    %v318 = vmul.f32 %v316, %v176
    %v319 = vadd.f32 %v313, %v318
    %v320 = vld [vmem:[#allocation7] sm:$0xff]
    %v321 = vld [vmem:[#allocation7 + $0x8] sm:$0x1]
    %v322 = vld [vmem:[%s4] sm:$0xff]
    %v323 = vld [vmem:[%s4 + $0x8] sm:$0xff]
    %v324 = vld [vmem:[%s4 + $0x10] sm:$0xff]
    %v325 = vld [vmem:[%s4 + $0x18] sm:$0xff]
    %v326 = vld [vmem:[%s4 + $0x20] sm:$0xff]
    %v327 = vld [vmem:[%s4 + $0x28] sm:$0xff]
    %v328 = vld [vmem:[%s4 + $0x30] sm:$0xff]
    %v329 = vld [vmem:[%s4 + $0x38] sm:$0xff]
    %v330 = vld [vmem:[%s4 + $0x40] sm:$0xff]
    %v331 = vld [vmem:[%s4 + $0x48] sm:$0xff]
    %v332 = vld [vmem:[%s4 + $0x50] sm:$0xff]
    %v333 = vld [vmem:[%s4 + $0x58] sm:$0xff]
    %v334 = vld [vmem:[%s4 + $0x60] sm:$0xff]
    %v335 = vld [vmem:[%s4 + $0x68] sm:$0xff]
    %v336 = vld [vmem:[%s4 + $0x70] sm:$0xff]
    %v337 = vld [vmem:[%s4 + $0x78] sm:$0xff]
    %338 = vmatpush.msra.mxu0 %v337
    %339 = vmatpush.msra.mxu0 %v336
    %340 = vmatpush.msra.mxu0 %v335
    %341 = vmatpush.msra.mxu0 %v334
    %342 = vmatpush.msra.mxu0 %v333
    %343 = vmatpush.msra.mxu0 %v332
    %344 = vmatpush.msra.mxu0 %v331
    %345 = vmatpush.msra.mxu0 %v330
    %346 = vmatpush.msra.mxu0 %v329
    %347 = vmatpush.msra.mxu0 %v328
    %348 = vmatpush.msra.mxu0 %v327
    %349 = vmatpush.msra.mxu0 %v326
    %350 = vmatpush.msra.mxu0 %v325
    %351 = vmatpush.msra.mxu0 %v324
    %352 = vmatpush.msra.mxu0 %v323
    %353 = vmatpush.msra.mxu0 %v322
    %354 = vmatmul.f32.gmra.mxu0 %v319
    %v355 = vpop.f32.mrf.mxu0
    %v356 = vadd.f32 0.0, %v355
    %357 = vdwg.mxu0
    %vm358 = vcmask 72704
    %v359 = vsel %vm358, %v104, 0
    %vm361 = vcmask 1040384
    %v363 = vsel %vm361, %v321, 0
    %365 = vmatpush.msra.mxu0 0.0
    %366 = vmatpush.msra.mxu0 0.0
    %367 = vmatpush.msra.mxu0 0.0
    %368 = vmatpush.msra.mxu0 0.0
    %369 = vmatpush.msra.mxu0 0.0
    %370 = vmatpush.msra.mxu0 0.0
    %371 = vmatpush.msra.mxu0 0.0
    %372 = vmatpush.msra.mxu0 0.0
    %373 = vmatpush.msra.mxu0 0.0
    %374 = vmatpush.msra.mxu0 0.0
    %375 = vmatpush.msra.mxu0 0.0
    %376 = vmatpush.msra.mxu0 0.0
    %377 = vmatpush.msra.mxu0 0.0
    %378 = vmatpush.msra.mxu0 0.0
    %379 = vmatpush.msra.mxu0 %v363
    %380 = vmatpush.msra.mxu0 %v320
    %381 = vmatmul.f32.gmra.mxu0 %v359
    %v382 = vpop.f32.mrf.mxu0
    %v383 = vadd.f32 %v356, %v382
    %384 = vdwg.mxu0
    %v385 = vadd.f32 %v383, %v109
    %v386 = vmax.f32 %v385, 0.0
    %v387 = vld [vmem:[#allocation8] sm:$0xff]
    %v388 = vld [vmem:[#allocation8 + $0x8] sm:$0xff]
    %v389 = vld [vmem:[#allocation8 + $0x10] sm:$0xff]
    %v390 = vld [vmem:[#allocation8 + $0x18] sm:$0xff]
    %v391 = vld [vmem:[#allocation8 + $0x20] sm:$0xff]
    %v392 = vld [vmem:[#allocation8 + $0x28] sm:$0xff]
    %v393 = vld [vmem:[#allocation8 + $0x30] sm:$0xff]
    %v394 = vld [vmem:[#allocation8 + $0x38] sm:$0xff]
    %v395 = vld [vmem:[#allocation8 + $0x40] sm:$0xff]
    %v396 = vld [vmem:[#allocation8 + $0x48] sm:$0xff]
    %v397 = vld [vmem:[#allocation8 + $0x50] sm:$0xff]
    %v398 = vld [vmem:[#allocation8 + $0x58] sm:$0xff]
    %v399 = vld [vmem:[#allocation8 + $0x60] sm:$0xff]
    %v400 = vld [vmem:[#allocation8 + $0x68] sm:$0xff]
    %v401 = vld [vmem:[#allocation8 + $0x70] sm:$0xff]
    %v402 = vld [vmem:[#allocation8 + $0x78] sm:$0xff]
    %403 = vmatpush.msra.mxu0 %v402
    %404 = vmatpush.msra.mxu0 %v401
    %405 = vmatpush.msra.mxu0 %v400
    %406 = vmatpush.msra.mxu0 %v399
    %407 = vmatpush.msra.mxu0 %v398
    %408 = vmatpush.msra.mxu0 %v397
    %409 = vmatpush.msra.mxu0 %v396
    %410 = vmatpush.msra.mxu0 %v395
    %411 = vmatpush.msra.mxu0 %v394
    %412 = vmatpush.msra.mxu0 %v393
    %413 = vmatpush.msra.mxu0 %v392
    %414 = vmatpush.msra.mxu0 %v391
    %415 = vmatpush.msra.mxu0 %v390
    %416 = vmatpush.msra.mxu0 %v389
    %417 = vmatpush.msra.mxu0 %v388
    %418 = vmatpush.msra.mxu0 %v387
    %419 = vmatmul.f32.gmra.mxu0 %v386
    %v420 = vpop.f32.mrf.mxu0
    %v421 = vadd.f32 %v110, %v420
    %422 = vdwg.mxu0
    %v423 = vmax.f32 %v421, 0.0
    %v424 = vld [vmem:[%s6] sm:$0xff]
    %v425 = vld [vmem:[%s6 + $0x8] sm:$0xff]
    %v426 = vld [vmem:[%s6 + $0x10] sm:$0xff]
    %v427 = vld [vmem:[%s6 + $0x18] sm:$0xff]
    %v428 = vld [vmem:[%s6 + $0x20] sm:$0xff]
    %v429 = vld [vmem:[%s6 + $0x28] sm:$0xff]
    %v430 = vld [vmem:[%s6 + $0x30] sm:$0xff]
    %v431 = vld [vmem:[%s6 + $0x38] sm:$0xff]
    %v432 = vld [vmem:[%s6 + $0x40] sm:$0xff]
    %v433 = vld [vmem:[%s6 + $0x48] sm:$0xff]
    %v434 = vld [vmem:[%s6 + $0x50] sm:$0xff]
    %v435 = vld [vmem:[%s6 + $0x58] sm:$0xff]
    %v436 = vld [vmem:[%s6 + $0x60] sm:$0xff]
    %v437 = vld [vmem:[%s6 + $0x68] sm:$0xff]
    %v438 = vld [vmem:[%s6 + $0x70] sm:$0xff]
    %v439 = vld [vmem:[%s6 + $0x78] sm:$0xff]
    %440 = vmatpush.msra.mxu0 %v439
    %441 = vmatpush.msra.mxu0 %v438
    %442 = vmatpush.msra.mxu0 %v437
    %443 = vmatpush.msra.mxu0 %v436
    %444 = vmatpush.msra.mxu0 %v435
    %445 = vmatpush.msra.mxu0 %v434
    %446 = vmatpush.msra.mxu0 %v433
    %447 = vmatpush.msra.mxu0 %v432
    %448 = vmatpush.msra.mxu0 %v431
    %449 = vmatpush.msra.mxu0 %v430
    %450 = vmatpush.msra.mxu0 %v429
    %451 = vmatpush.msra.mxu0 %v428
    %452 = vmatpush.msra.mxu0 %v427
    %453 = vmatpush.msra.mxu0 %v426
    %454 = vmatpush.msra.mxu0 %v425
    %455 = vmatpush.msra.mxu0 %v424
    %456 = vmatmul.f32.gmra.mxu0 %v423
    %v457 = vpop.f32.mrf.mxu0
    %v458 = vadd.f32 %v111, %v457
    %459 = vdwg.mxu0
    %461 = vset.pattern.permute.xlu0 5
    %462 = vperm.xlu0 %461, %v458
    %v463 = vpop.permute.xlu0 %462
    %v465 = vadd.f32 %v463, %v458
    %vm466 = vcmask 35840
    %v467 = vsel %vm466, %v458, 0.0
    %468 = vadd.xlane.f32.xlu0 %v467
    %v469 = vpop.xlane.xlu0 %468
    %v470 = vrcp.pop 5.0
    %v471 = vmul.f32 5.0, %v470
    %v472 = vsub.f32 1.0, %v471
    %v473 = vmul.f32 %v470, %v472
    %v474 = vadd.f32 %v470, %v473
    %vm475 = vweird.f32 %v470
    %v476 = vsel %vm475, %v470, %v474
    %v477 = vmul.f32 %v469, %v476
    %v478 = vsub.f32 %v465, %v477
    %479 = vrot.lane.b32.xlu0 %v307, 5
    %v480 = vpop.permute.xlu0 %479
    %vm482 = vcmask 39936
    %v483 = vsel %vm482, %v478, %v480
    %vm484 = vcmask 56320
    %v485 = vsel %vm484, %v483, 0.0
    %vm486 = vcmask 60416
    %487 = vst.msk [vmem:[#allocation11] sm:$0xf] %vm486, %v485
    // Predicated region
    $region54: #{tpu_custom_call.1} parent=1 // pred_check
      _
    $region55: #{tpu_custom_call.1} parent=1 // pred_check_branch
      %489 = sbr.rel (0) target = $region57
    $region56: #{tpu_custom_call.1} parent=1 // pred_region
      %491 = vsyncadd [#allocation4], 0
      %s493 = sshll.u32 [#allocation11], 4
      %s494 = int_to_ptr.vmem [resolvable:$true] %s493
      %s495 = sshll.u32 %s8, 4
      %s496 = int_to_ptr.hbm [resolvable:$true] %s495
      %498 = dma.vmem_to_hbm [thread:$0]  %s494, 64, %s496, [#allocation4]
    $region57: #{tpu_custom_call.1} parent=1 // pred_fallthru
      _
    // Predicated region
    $region58: #{tpu_custom_call.1} parent=1 // pred_check
      _
    $region59: #{tpu_custom_call.1} parent=1 // pred_check_branch
      %500 = sbr.rel (0) target = $region61
    $region60: #{tpu_custom_call.1} parent=1 // pred_region
      %502 = dma.done [#allocation4], 64
    $region61: #{tpu_custom_call.1} parent=1 // pred_fallthru
      _
    %503 = vsyncpa [#allocation3], 1
    %504 = vsyncpa [#allocation6], 1
    %505 = vsyncpa [#allocation9], 1
    %506 = vsyncpa [#allocation4], 1

</llo_original>
